<compile_context>
chip_gen: v7x
topology: tpu7x:2x2x1
jax: 0.10.0
libtpu: 0.0.40
codegen_flags: <defaults>
</compile_context>

<pallas_src>
import jax
import jax.numpy as jnp
from jax.experimental import pallas as pl
from jax.experimental.pallas import tpu as pltpu


def _round_up(x, m):
    return (x + m - 1) // m * m


def gru_decode_kernel(
    tok_ref,    # SMEM (T, B) int32 token ids (scalar-prefetched)
    h0_ref,     # (B, Hp)        f32  initial hidden state (used at t == 0 only)
    emb_ref,    # (Vr, Ep)       f32  embedding table, resident in VMEM
    w_blk_ref,  # (Ep+Hp, 4Hp)   bf16 fused gate weights [r | z | gi_n | gh_n]
    b_ref,      # (4, Hp)        f32  packed biases [b_r, b_z, b_in, b_hn]
    w_fc_ref,   # (Hp, Vp)       bf16 fc weights
    b_fc_ref,   # (1, Vp)        f32  fc bias
    pred_ref,   # out (B, Vp)    f32  logits for this timestep (squeezed T axis)
    hout_ref,   # out (B, Hp)    f32  final hidden state (resident, flushed at end)
    xh_ref,     # scratch (B, Ep+Hp) f32  fused matmul operand; h lives in [:, Ep:]
):
    B, Hp = h0_ref.shape
    Ep = emb_ref.shape[1]
    t = pl.program_id(0)

    # Load the initial hidden state into the resident operand scratch once; after
    # that the recurrence lives entirely in VMEM across grid steps.
    @pl.when(t == 0)
    def _():
        xh_ref[:, Ep:] = h0_ref[...]

    # Embedding gather: token ids from SMEM, table resident in VMEM.
    # nn.Dropout(p=0.5) / GRU dropout are training-time only -> identity here.
    for b in range(B):
        tok = tok_ref[t, b]
        xh_ref[pl.ds(b, 1), 0:Ep] = emb_ref[pl.ds(tok, 1), :]

    h = xh_ref[:, Ep:]

    # Single fused MXU matmul (bf16 operands, f32 accumulate):
    #   [x | h] @ [[W_ir W_iz W_in 0   ]   ->  columns [r_pre | z_pre | gi_n | gh_n]
    #              [W_hr W_hz 0    W_hn]]
    g = jnp.dot(xh_ref[...].astype(jnp.bfloat16), w_blk_ref[...],
                preferred_element_type=jnp.float32)            # (B, 4Hp)

    # Gate math in f32 (v5e VPU/EUP has no bf16 path; better numerics for long
    # decode).  PyTorch GRU gate order r, z, n with n-gate bias placement kept.
    r = jax.nn.sigmoid(g[:, 0:Hp] + b_ref[0:1, :])
    z = jax.nn.sigmoid(g[:, Hp:2 * Hp] + b_ref[1:2, :])
    n = jnp.tanh(g[:, 2 * Hp:3 * Hp] + b_ref[2:3, :]
                 + r * (g[:, 3 * Hp:4 * Hp] + b_ref[3:4, :]))
    h_new = (1.0 - z) * n + z * h

    # Single-layer GRU: output == new hidden; fc applied to output.squeeze(0).
    pred_ref[...] = jnp.dot(h_new.astype(jnp.bfloat16), w_fc_ref[...],
                            preferred_element_type=jnp.float32) + b_fc_ref[...]

    xh_ref[:, Ep:] = h_new     # carry the recurrence in VMEM
    hout_ref[...] = h_new      # resident output block, written back once at the end


def init_params(key, hidden_size, emb_size, vocab_size):
    """Deterministic synthetic parameters, shapes matching the PyTorch module."""
    ks = jax.random.split(key, 7)
    bound = 1.0 / jnp.sqrt(hidden_size)
    u = lambda k, shape, b: jax.random.uniform(k, shape, jnp.float32, -b, b)

    embedding = jax.random.normal(ks[0], (vocab_size, emb_size), jnp.float32)
    w_ih = u(ks[1], (3 * hidden_size, emb_size), bound)       # nn.GRU weight_ih_l0
    w_hh = u(ks[2], (3 * hidden_size, hidden_size), bound)    # nn.GRU weight_hh_l0
    b_ih = u(ks[3], (3 * hidden_size,), bound)
    b_hh = u(ks[4], (3 * hidden_size,), bound)
    w_fc = u(ks[5], (vocab_size, hidden_size), bound)         # nn.Linear weight
    b_fc = u(ks[6], (vocab_size,), bound)
    return dict(embedding=embedding, w_ih=w_ih, w_hh=w_hh,
                b_ih=b_ih, b_hh=b_hh, w_fc=w_fc, b_fc=b_fc)


def pack_params(raw, hidden_size, emb_size, vocab_size):
    """Fuse / transpose / zero-pad parameters into kernel-ready, lane-aligned buffers.

    Zero-pad invariant: every pad row/column of the weights and biases is exactly 0,
    which keeps the pad lanes of the carried hidden state at 0 and keeps pad lanes
    out of the logits.  Do not break this when changing the packing.
    """
    H, E, V = hidden_size, emb_size, vocab_size
    Hp, Ep, Vp = _round_up(H, 128), _round_up(E, 128), _round_up(V, 128)
    Vr = _round_up(V, 8)                      # sublane-aligned embedding row count

    w_ih, w_hh = raw["w_ih"], raw["w_hh"]
    b_ih, b_hh = raw["b_ih"], raw["b_hh"]

    # Fused block weight (Ep+Hp, 4Hp): rows = [x | h], cols = [r | z | gi_n | gh_n].
    w_blk = jnp.zeros((Ep + Hp, 4 * Hp), jnp.float32)
    for gate in (0, 1):                        # r, z: input + hidden paths summed
        w_blk = w_blk.at[:E, gate * Hp:gate * Hp + H].set(
            w_ih[gate * H:(gate + 1) * H, :].T)
        w_blk = w_blk.at[Ep:Ep + H, gate * Hp:gate * Hp + H].set(
            w_hh[gate * H:(gate + 1) * H, :].T)
    w_blk = w_blk.at[:E, 2 * Hp:2 * Hp + H].set(w_ih[2 * H:3 * H, :].T)       # gi_n
    w_blk = w_blk.at[Ep:Ep + H, 3 * Hp:3 * Hp + H].set(w_hh[2 * H:3 * H, :].T)  # gh_n

    # Packed biases: [b_r(=b_ir+b_hr), b_z, b_in, b_hn].
    b = jnp.zeros((4, Hp), jnp.float32)
    b = b.at[0, :H].set(b_ih[0:H] + b_hh[0:H])
    b = b.at[1, :H].set(b_ih[H:2 * H] + b_hh[H:2 * H])
    b = b.at[2, :H].set(b_ih[2 * H:3 * H])
    b = b.at[3, :H].set(b_hh[2 * H:3 * H])

    emb_p = jnp.zeros((Vr, Ep), jnp.float32).at[:V, :E].set(raw["embedding"])
    w_fc_p = jnp.zeros((Hp, Vp), jnp.float32).at[:H, :V].set(raw["w_fc"].T)
    b_fc_p = jnp.zeros((1, Vp), jnp.float32).at[0, :V].set(raw["b_fc"])

    return dict(
        emb=emb_p,                             # f32 table (bf16 only pays at real V)
        w_blk=w_blk.astype(jnp.bfloat16),
        b=b,
        w_fc=w_fc_p.astype(jnp.bfloat16),
        b_fc=b_fc_p,
        dims=(H, E, V, Hp, Ep, Vp, Vr),
    )


def rnn_decoder_decode(token_seq, hidden, packed):
    """Multi-step decode in one pallas_call.

    token_seq: (T, B) int32  -- one token batch per timestep
    hidden:    (1, B, H) f32 -- initial GRU hidden state
    returns (predictions (T, B, V), hidden (1, B, H))
    """
    H, E, V, Hp, Ep, Vp, Vr = packed["dims"]
    T, B = token_seq.shape

    h_p = jnp.zeros((B, Hp), jnp.float32).at[:, :H].set(hidden[0])  # once per call

    const = lambda t, tok: (0, 0)   # resident blocks (weights / biases / h)
    grid_spec = pltpu.PrefetchScalarGridSpec(
        num_scalar_prefetch=1,                      # token ids -> SMEM
        grid=(T,),
        in_specs=[
            pl.BlockSpec((B, Hp), const),           # h0
            pl.BlockSpec((Vr, Ep), const),          # embedding table
            pl.BlockSpec((Ep + Hp, 4 * Hp), const),  # fused gate weights
            pl.BlockSpec((4, Hp), const),           # packed biases
            pl.BlockSpec((Hp, Vp), const),          # fc weights
            pl.BlockSpec((1, Vp), const),           # fc bias
        ],
        out_specs=(
            pl.BlockSpec((None, B, Vp), lambda t, tok: (t, 0, 0)),  # per-step logits
            pl.BlockSpec((B, Hp), const),                           # final hidden
        ),
        scratch_shapes=[pltpu.VMEM((B, Ep + Hp), jnp.float32)],     # [x | h] operand
    )

    flops = 2 * T * B * ((Ep + Hp) * 4 * Hp + Hp * Vp)
    transcendentals = 3 * T * B * Hp
    bytes_accessed = int(
        packed["w_blk"].size * 2 + packed["w_fc"].size * 2 + packed["emb"].size * 4
        + packed["b"].size * 4 + packed["b_fc"].size * 4
        + 2 * B * Hp * 4 + T * (B * Vp * 4 + B * 4))

    preds_p, h_out = pl.pallas_call(
        gru_decode_kernel,
        grid_spec=grid_spec,
        out_shape=(
            jax.ShapeDtypeStruct((T, B, Vp), jnp.float32),
            jax.ShapeDtypeStruct((B, Hp), jnp.float32),
        ),
        compiler_params=pltpu.CompilerParams(
            dimension_semantics=("arbitrary",)),    # sequential recurrence over T
        cost_estimate=pl.CostEstimate(
            flops=flops, transcendentals=transcendentals,
            bytes_accessed=bytes_accessed),
    )(token_seq.astype(jnp.int32), h_p,
      packed["emb"], packed["w_blk"], packed["b"], packed["w_fc"], packed["b_fc"])

    # One slice per call (amortized over T), not per step.
    return preds_p[:, :, :V], h_out[:, :H][None]


def rnn_decoder_forward(token_ids, hidden, packed):
    """Module-equivalent forward: one step.  token_ids (B,), hidden (1, B, H)."""
    preds, h_new = rnn_decoder_decode(token_ids[None, :], hidden, packed)
    return preds[0], h_new


def reference_decode(token_seq, hidden, raw):
    """Pure-JAX reference with the same bf16-weight / f32-accumulate math."""
    H = raw["w_hh"].shape[1]
    w_ih_b = raw["w_ih"].T.astype(jnp.bfloat16)
    w_hh_b = raw["w_hh"].T.astype(jnp.bfloat16)
    w_fc_b = raw["w_fc"].T.astype(jnp.bfloat16)
    b_ih, b_hh = raw["b_ih"], raw["b_hh"]

    h = hidden[0]
    preds = []
    for t in range(token_seq.shape[0]):
        x = raw["embedding"][token_seq[t]]
        gi = jnp.dot(x.astype(jnp.bfloat16), w_ih_b,
                     preferred_element_type=jnp.float32)
        gh = jnp.dot(h.astype(jnp.bfloat16), w_hh_b,
                     preferred_element_type=jnp.float32)
        r = jax.nn.sigmoid(gi[:, 0:H] + gh[:, 0:H] + (b_ih[0:H] + b_hh[0:H]))
        z = jax.nn.sigmoid(gi[:, H:2 * H] + gh[:, H:2 * H]
                           + (b_ih[H:2 * H] + b_hh[H:2 * H]))
        n = jnp.tanh(gi[:, 2 * H:] + b_ih[2 * H:]
                     + r * (gh[:, 2 * H:] + b_hh[2 * H:]))
        h = (1.0 - z) * n + z * h
        preds.append(jnp.dot(h.astype(jnp.bfloat16), w_fc_b,
                             preferred_element_type=jnp.float32) + raw["b_fc"])
    return jnp.stack(preds), h[None]


if __name__ == "__main__":
    HIDDEN, EMB, VOCAB, BATCH, STEPS = 32, 32, 64, 8, 6

    key = jax.random.PRNGKey(0)
    k_par, k_tok, k_hid = jax.random.split(key, 3)

    raw = init_params(k_par, HIDDEN, EMB, VOCAB)
    packed = pack_params(raw, HIDDEN, EMB, VOCAB)

    token_seq = jax.random.randint(k_tok, (STEPS, BATCH), 0, VOCAB, dtype=jnp.int32)
    hidden = jax.random.normal(k_hid, (1, BATCH, HIDDEN), jnp.float32)

    # Multi-step decode: one pallas_call, grid over timesteps, weights resident.
    preds, h_T = rnn_decoder_decode(token_seq, hidden, packed)
    jax.block_until_ready((preds, h_T))

    ref_preds, ref_hT = reference_decode(token_seq, hidden, raw)
    assert preds.shape == (STEPS, BATCH, VOCAB)
    assert h_T.shape == (1, BATCH, HIDDEN)
    assert jnp.allclose(preds, ref_preds, atol=2e-3, rtol=2e-3)
    assert jnp.allclose(h_T, ref_hT, atol=2e-3, rtol=2e-3)

    # Module-equivalent single-step forward (same kernel, T == 1).
    pred1, h1 = rnn_decoder_forward(token_seq[0], hidden, packed)
    jax.block_until_ready((pred1, h1))
    ref_p1, ref_h1 = reference_decode(token_seq[:1], hidden, raw)
    assert pred1.shape == (BATCH, VOCAB)
    assert h1.shape == (1, BATCH, HIDDEN)
    assert jnp.allclose(pred1, ref_p1[0], atol=2e-3, rtol=2e-3)
    assert jnp.allclose(h1, ref_h1, atol=2e-3, rtol=2e-3)

    print("KERNEL_OK")
</pallas_src>

<mosaic_0001>
module attributes {stable_mosaic.version = 11 : i64} {
  func.func @gru_decode_kernel(%arg0: i32, %arg1: memref<6x8xi32, #tpu.memory_space<smem>>, %arg2: memref<8x128xf32, #tpu.memory_space<vmem>>, %arg3: memref<64x128xf32, #tpu.memory_space<vmem>>, %arg4: memref<256x512xbf16, #tpu.memory_space<vmem>>, %arg5: memref<4x128xf32, #tpu.memory_space<vmem>>, %arg6: memref<128x128xbf16, #tpu.memory_space<vmem>>, %arg7: memref<1x128xf32, #tpu.memory_space<vmem>>, %arg8: memref<1x8x128xf32, #tpu.memory_space<vmem>>, %arg9: memref<8x128xf32, #tpu.memory_space<vmem>>, %arg10: memref<8x256xf32, #tpu.memory_space<vmem>>) attributes {dimension_semantics = [#tpu.dimension_semantics<arbitrary>], iteration_bounds = array<i64: 6>, scalar_prefetch = 1 : i64, scratch_operands = 1 : i64, tpu.core_type = #tpu.core_type<tc>, window_params = [{pipeline_mode = #tpu.pipeline_mode<synchronous>, transform_indices = @transform_0, window_bounds = array<i64: 8, 128>}, {pipeline_mode = #tpu.pipeline_mode<synchronous>, transform_indices = @transform_1, window_bounds = array<i64: 64, 128>}, {pipeline_mode = #tpu.pipeline_mode<synchronous>, transform_indices = @transform_2, window_bounds = array<i64: 256, 512>}, {pipeline_mode = #tpu.pipeline_mode<synchronous>, transform_indices = @transform_3, window_bounds = array<i64: 4, 128>}, {pipeline_mode = #tpu.pipeline_mode<synchronous>, transform_indices = @transform_4, window_bounds = array<i64: 128, 128>}, {pipeline_mode = #tpu.pipeline_mode<synchronous>, transform_indices = @transform_5, window_bounds = array<i64: 1, 128>}, {transform_indices = @transform_6, window_bounds = array<i64: 1, 8, 128>}, {pipeline_mode = #tpu.pipeline_mode<synchronous>, transform_indices = @transform_7, window_bounds = array<i64: 8, 128>}]} {
    %c0_i32 = arith.constant 0 : i32
    %0 = arith.cmpi eq, %arg0, %c0_i32 : i32
    %1 = arith.extui %0 : i1 to i32
    %c0_i32_0 = arith.constant 0 : i32
    %2 = arith.cmpi ne, %1, %c0_i32_0 : i32
    scf.if %2 {
      %c0_53 = arith.constant 0 : index
      %c0_54 = arith.constant 0 : index
      %93 = vector.load %arg2[%c0_53, %c0_54] : memref<8x128xf32, #tpu.memory_space<vmem>>, vector<8x128xf32>
      %c0_55 = arith.constant 0 : index
      %c128_56 = arith.constant 128 : index
      %94 = vector.load %arg10[%c0_55, %c128_56] : memref<8x256xf32, #tpu.memory_space<vmem>>, vector<8x128xf32>
      tpu.vector_store %arg10[%c0_55, %c128_56], %93 {strides = array<i32>} : memref<8x256xf32, #tpu.memory_space<vmem>>, vector<8x128xf32>,
    } else {
    }
    %3 = arith.index_cast %arg0 : i32 to index
    %c0 = arith.constant 0 : index
    %4 = memref.load %arg1[%3, %c0] : memref<6x8xi32, #tpu.memory_space<smem>>
    %5 = arith.index_cast %4 : i32 to index
    %c0_1 = arith.constant 0 : index
    %6 = vector.load %arg3[%5, %c0_1] : memref<64x128xf32, #tpu.memory_space<vmem>>, vector<1x128xf32>
    %c0_2 = arith.constant 0 : index
    %c0_3 = arith.constant 0 : index
    %7 = vector.load %arg10[%c0_2, %c0_3] : memref<8x256xf32, #tpu.memory_space<vmem>>, vector<1x128xf32>
    tpu.vector_store %arg10[%c0_2, %c0_3], %6 {strides = array<i32>} : memref<8x256xf32, #tpu.memory_space<vmem>>, vector<1x128xf32>,
    %8 = arith.index_cast %arg0 : i32 to index
    %c1 = arith.constant 1 : index
    %9 = memref.load %arg1[%8, %c1] : memref<6x8xi32, #tpu.memory_space<smem>>
    %10 = arith.index_cast %9 : i32 to index
    %c0_4 = arith.constant 0 : index
    %11 = vector.load %arg3[%10, %c0_4] : memref<64x128xf32, #tpu.memory_space<vmem>>, vector<1x128xf32>
    %c1_5 = arith.constant 1 : index
    %c0_6 = arith.constant 0 : index
    %12 = vector.load %arg10[%c1_5, %c0_6] : memref<8x256xf32, #tpu.memory_space<vmem>>, vector<1x128xf32>
    tpu.vector_store %arg10[%c1_5, %c0_6], %11 {strides = array<i32>} : memref<8x256xf32, #tpu.memory_space<vmem>>, vector<1x128xf32>,
    %13 = arith.index_cast %arg0 : i32 to index
    %c2 = arith.constant 2 : index
    %14 = memref.load %arg1[%13, %c2] : memref<6x8xi32, #tpu.memory_space<smem>>
    %15 = arith.index_cast %14 : i32 to index
    %c0_7 = arith.constant 0 : index
    %16 = vector.load %arg3[%15, %c0_7] : memref<64x128xf32, #tpu.memory_space<vmem>>, vector<1x128xf32>
    %c2_8 = arith.constant 2 : index
    %c0_9 = arith.constant 0 : index
    %17 = vector.load %arg10[%c2_8, %c0_9] : memref<8x256xf32, #tpu.memory_space<vmem>>, vector<1x128xf32>
    tpu.vector_store %arg10[%c2_8, %c0_9], %16 {strides = array<i32>} : memref<8x256xf32, #tpu.memory_space<vmem>>, vector<1x128xf32>,
    %18 = arith.index_cast %arg0 : i32 to index
    %c3 = arith.constant 3 : index
    %19 = memref.load %arg1[%18, %c3] : memref<6x8xi32, #tpu.memory_space<smem>>
    %20 = arith.index_cast %19 : i32 to index
    %c0_10 = arith.constant 0 : index
    %21 = vector.load %arg3[%20, %c0_10] : memref<64x128xf32, #tpu.memory_space<vmem>>, vector<1x128xf32>
    %c3_11 = arith.constant 3 : index
    %c0_12 = arith.constant 0 : index
    %22 = vector.load %arg10[%c3_11, %c0_12] : memref<8x256xf32, #tpu.memory_space<vmem>>, vector<1x128xf32>
    tpu.vector_store %arg10[%c3_11, %c0_12], %21 {strides = array<i32>} : memref<8x256xf32, #tpu.memory_space<vmem>>, vector<1x128xf32>,
    %23 = arith.index_cast %arg0 : i32 to index
    %c4 = arith.constant 4 : index
    %24 = memref.load %arg1[%23, %c4] : memref<6x8xi32, #tpu.memory_space<smem>>
    %25 = arith.index_cast %24 : i32 to index
    %c0_13 = arith.constant 0 : index
    %26 = vector.load %arg3[%25, %c0_13] : memref<64x128xf32, #tpu.memory_space<vmem>>, vector<1x128xf32>
    %c4_14 = arith.constant 4 : index
    %c0_15 = arith.constant 0 : index
    %27 = vector.load %arg10[%c4_14, %c0_15] : memref<8x256xf32, #tpu.memory_space<vmem>>, vector<1x128xf32>
    tpu.vector_store %arg10[%c4_14, %c0_15], %26 {strides = array<i32>} : memref<8x256xf32, #tpu.memory_space<vmem>>, vector<1x128xf32>,
    %28 = arith.index_cast %arg0 : i32 to index
    %c5 = arith.constant 5 : index
    %29 = memref.load %arg1[%28, %c5] : memref<6x8xi32, #tpu.memory_space<smem>>
    %30 = arith.index_cast %29 : i32 to index
    %c0_16 = arith.constant 0 : index
    %31 = vector.load %arg3[%30, %c0_16] : memref<64x128xf32, #tpu.memory_space<vmem>>, vector<1x128xf32>
    %c5_17 = arith.constant 5 : index
    %c0_18 = arith.constant 0 : index
    %32 = vector.load %arg10[%c5_17, %c0_18] : memref<8x256xf32, #tpu.memory_space<vmem>>, vector<1x128xf32>
    tpu.vector_store %arg10[%c5_17, %c0_18], %31 {strides = array<i32>} : memref<8x256xf32, #tpu.memory_space<vmem>>, vector<1x128xf32>,
    %33 = arith.index_cast %arg0 : i32 to index
    %c6 = arith.constant 6 : index
    %34 = memref.load %arg1[%33, %c6] : memref<6x8xi32, #tpu.memory_space<smem>>
    %35 = arith.index_cast %34 : i32 to index
    %c0_19 = arith.constant 0 : index
    %36 = vector.load %arg3[%35, %c0_19] : memref<64x128xf32, #tpu.memory_space<vmem>>, vector<1x128xf32>
    %c6_20 = arith.constant 6 : index
    %c0_21 = arith.constant 0 : index
    %37 = vector.load %arg10[%c6_20, %c0_21] : memref<8x256xf32, #tpu.memory_space<vmem>>, vector<1x128xf32>
    tpu.vector_store %arg10[%c6_20, %c0_21], %36 {strides = array<i32>} : memref<8x256xf32, #tpu.memory_space<vmem>>, vector<1x128xf32>,
    %38 = arith.index_cast %arg0 : i32 to index
    %c7 = arith.constant 7 : index
    %39 = memref.load %arg1[%38, %c7] : memref<6x8xi32, #tpu.memory_space<smem>>
    %40 = arith.index_cast %39 : i32 to index
    %c0_22 = arith.constant 0 : index
    %41 = vector.load %arg3[%40, %c0_22] : memref<64x128xf32, #tpu.memory_space<vmem>>, vector<1x128xf32>
    %c7_23 = arith.constant 7 : index
    %c0_24 = arith.constant 0 : index
    %42 = vector.load %arg10[%c7_23, %c0_24] : memref<8x256xf32, #tpu.memory_space<vmem>>, vector<1x128xf32>
    tpu.vector_store %arg10[%c7_23, %c0_24], %41 {strides = array<i32>} : memref<8x256xf32, #tpu.memory_space<vmem>>, vector<1x128xf32>,
    %c0_25 = arith.constant 0 : index
    %c128 = arith.constant 128 : index
    %43 = vector.load %arg10[%c0_25, %c128] : memref<8x256xf32, #tpu.memory_space<vmem>>, vector<8x128xf32>
    %c0_26 = arith.constant 0 : index
    %c0_27 = arith.constant 0 : index
    %44 = vector.load %arg10[%c0_26, %c0_27] : memref<8x256xf32, #tpu.memory_space<vmem>>, vector<8x256xf32>
    %45 = arith.truncf %44 : vector<8x256xf32> to vector<8x256xbf16>
    %c0_28 = arith.constant 0 : index
    %c0_29 = arith.constant 0 : index
    %46 = vector.load %arg4[%c0_28, %c0_29] : memref<256x512xbf16, #tpu.memory_space<vmem>>, vector<256x512xbf16>
    %cst = arith.constant dense<0.000000e+00> : vector<8x512xf32>
    %47 = tpu.matmul %45, %46, %cst {dimension_numbers = #tpu.dot_dimension_numbers<[1], [0], [0], [1], [0, 0, 1, 1], [], []>} : vector<8x256xbf16>, vector<256x512xbf16>, vector<8x512xf32> -> vector<8x512xf32>
    %48 = vector.extract_strided_slice %47 {offsets = [0, 0], sizes = [8, 128], strides = [1, 1]} : vector<8x512xf32> to vector<8x128xf32>
    %c0_30 = arith.constant 0 : index
    %c0_31 = arith.constant 0 : index
    %49 = vector.load %arg5[%c0_30, %c0_31] : memref<4x128xf32, #tpu.memory_space<vmem>>, vector<1x128xf32>
    %50 = vector.broadcast %49 : vector<1x128xf32> to vector<8x128xf32>
    %51 = arith.addf %48, %50 : vector<8x128xf32>
    %52 = arith.negf %51 : vector<8x128xf32>
    %53 = math.exp %52 : vector<8x128xf32>
    %cst_32 = arith.constant 1.000000e+00 : f32
    %54 = vector.broadcast %cst_32 : f32 to vector<8x128xf32>
    %55 = arith.addf %54, %53 : vector<8x128xf32>
    %56 = arith.divf %54, %55 : vector<8x128xf32>
    %57 = vector.extract_strided_slice %47 {offsets = [0, 128], sizes = [8, 128], strides = [1, 1]} : vector<8x512xf32> to vector<8x128xf32>
    %c1_33 = arith.constant 1 : index
    %c0_34 = arith.constant 0 : index
    %58 = vector.load %arg5[%c1_33, %c0_34] : memref<4x128xf32, #tpu.memory_space<vmem>>, vector<1x128xf32>
    %59 = vector.broadcast %58 : vector<1x128xf32> to vector<8x128xf32>
    %60 = arith.addf %57, %59 : vector<8x128xf32>
    %61 = arith.negf %60 : vector<8x128xf32>
    %62 = math.exp %61 : vector<8x128xf32>
    %cst_35 = arith.constant 1.000000e+00 : f32
    %63 = vector.broadcast %cst_35 : f32 to vector<8x128xf32>
    %64 = arith.addf %63, %62 : vector<8x128xf32>
    %65 = arith.divf %63, %64 : vector<8x128xf32>
    %66 = vector.extract_strided_slice %47 {offsets = [0, 256], sizes = [8, 128], strides = [1, 1]} : vector<8x512xf32> to vector<8x128xf32>
    %c2_36 = arith.constant 2 : index
    %c0_37 = arith.constant 0 : index
    %67 = vector.load %arg5[%c2_36, %c0_37] : memref<4x128xf32, #tpu.memory_space<vmem>>, vector<1x128xf32>
    %68 = vector.broadcast %67 : vector<1x128xf32> to vector<8x128xf32>
    %69 = arith.addf %66, %68 : vector<8x128xf32>
    %70 = vector.extract_strided_slice %47 {offsets = [0, 384], sizes = [8, 128], strides = [1, 1]} : vector<8x512xf32> to vector<8x128xf32>
    %c3_38 = arith.constant 3 : index
    %c0_39 = arith.constant 0 : index
    %71 = vector.load %arg5[%c3_38, %c0_39] : memref<4x128xf32, #tpu.memory_space<vmem>>, vector<1x128xf32>
    %72 = vector.broadcast %71 : vector<1x128xf32> to vector<8x128xf32>
    %73 = arith.addf %70, %72 : vector<8x128xf32>
    %74 = arith.mulf %56, %73 : vector<8x128xf32>
    %75 = arith.addf %69, %74 : vector<8x128xf32>
    %76 = math.tanh %75 : vector<8x128xf32>
    %cst_40 = arith.constant 1.000000e+00 : f32
    %77 = vector.broadcast %cst_40 : f32 to vector<8x128xf32>
    %78 = arith.subf %77, %65 : vector<8x128xf32>
    %79 = arith.mulf %78, %76 : vector<8x128xf32>
    %80 = arith.mulf %65, %43 : vector<8x128xf32>
    %81 = arith.addf %79, %80 : vector<8x128xf32>
    %82 = arith.truncf %81 : vector<8x128xf32> to vector<8x128xbf16>
    %c0_41 = arith.constant 0 : index
    %c0_42 = arith.constant 0 : index
    %83 = vector.load %arg6[%c0_41, %c0_42] : memref<128x128xbf16, #tpu.memory_space<vmem>>, vector<128x128xbf16>
    %cst_43 = arith.constant dense<0.000000e+00> : vector<8x128xf32>
    %84 = tpu.matmul %82, %83, %cst_43 {dimension_numbers = #tpu.dot_dimension_numbers<[1], [0], [0], [1], [0, 0, 1, 1], [], []>} : vector<8x128xbf16>, vector<128x128xbf16>, vector<8x128xf32> -> vector<8x128xf32>
    %c0_44 = arith.constant 0 : index
    %c0_45 = arith.constant 0 : index
    %85 = vector.load %arg7[%c0_44, %c0_45] : memref<1x128xf32, #tpu.memory_space<vmem>>, vector<1x128xf32>
    %86 = vector.broadcast %85 : vector<1x128xf32> to vector<8x128xf32>
    %87 = arith.addf %84, %86 : vector<8x128xf32>
    %c0_46 = arith.constant 0 : index
    %c0_47 = arith.constant 0 : index
    %c0_48 = arith.constant 0 : index
    %88 = vector.load %arg8[%c0_46, %c0_47, %c0_48] : memref<1x8x128xf32, #tpu.memory_space<vmem>>, vector<1x8x128xf32>
    %89 = vector.shape_cast %88 : vector<1x8x128xf32> to vector<8x128xf32>
    %90 = vector.shape_cast %87 : vector<8x128xf32> to vector<1x8x128xf32>
    tpu.vector_store %arg8[%c0_46, %c0_47, %c0_48], %90 {strides = array<i32>} : memref<1x8x128xf32, #tpu.memory_space<vmem>>, vector<1x8x128xf32>,
    %c0_49 = arith.constant 0 : index
    %c128_50 = arith.constant 128 : index
    %91 = vector.load %arg10[%c0_49, %c128_50] : memref<8x256xf32, #tpu.memory_space<vmem>>, vector<8x128xf32>
    tpu.vector_store %arg10[%c0_49, %c128_50], %81 {strides = array<i32>} : memref<8x256xf32, #tpu.memory_space<vmem>>, vector<8x128xf32>,
    %c0_51 = arith.constant 0 : index
    %c0_52 = arith.constant 0 : index
    %92 = vector.load %arg9[%c0_51, %c0_52] : memref<8x128xf32, #tpu.memory_space<vmem>>, vector<8x128xf32>
    tpu.vector_store %arg9[%c0_51, %c0_52], %81 {strides = array<i32>} : memref<8x128xf32, #tpu.memory_space<vmem>>, vector<8x128xf32>,
    return
  }
  func.func @transform_0(%arg0: i32, %arg1: memref<6x8xi32, #tpu.memory_space<smem>>) -> (i32, i32) {
    %c0_i32 = arith.constant 0 : i32
    %c0_i32_0 = arith.constant 0 : i32
    %c0_i32_1 = arith.constant 0 : i32
    return %c0_i32, %c0_i32_0 : i32, i32
  }
  func.func @transform_1(%arg0: i32, %arg1: memref<6x8xi32, #tpu.memory_space<smem>>) -> (i32, i32) {
    %c0_i32 = arith.constant 0 : i32
    %c0_i32_0 = arith.constant 0 : i32
    %c0_i32_1 = arith.constant 0 : i32
    return %c0_i32, %c0_i32_0 : i32, i32
  }
  func.func @transform_2(%arg0: i32, %arg1: memref<6x8xi32, #tpu.memory_space<smem>>) -> (i32, i32) {
    %c0_i32 = arith.constant 0 : i32
    %c0_i32_0 = arith.constant 0 : i32
    %c0_i32_1 = arith.constant 0 : i32
    return %c0_i32, %c0_i32_0 : i32, i32
  }
  func.func @transform_3(%arg0: i32, %arg1: memref<6x8xi32, #tpu.memory_space<smem>>) -> (i32, i32) {
    %c0_i32 = arith.constant 0 : i32
    %c0_i32_0 = arith.constant 0 : i32
    %c0_i32_1 = arith.constant 0 : i32
    return %c0_i32, %c0_i32_0 : i32, i32
  }
  func.func @transform_4(%arg0: i32, %arg1: memref<6x8xi32, #tpu.memory_space<smem>>) -> (i32, i32) {
    %c0_i32 = arith.constant 0 : i32
    %c0_i32_0 = arith.constant 0 : i32
    %c0_i32_1 = arith.constant 0 : i32
    return %c0_i32, %c0_i32_0 : i32, i32
  }
  func.func @transform_5(%arg0: i32, %arg1: memref<6x8xi32, #tpu.memory_space<smem>>) -> (i32, i32) {
    %c0_i32 = arith.constant 0 : i32
    %c0_i32_0 = arith.constant 0 : i32
    %c0_i32_1 = arith.constant 0 : i32
    return %c0_i32, %c0_i32_0 : i32, i32
  }
  func.func @transform_6(%arg0: i32, %arg1: memref<6x8xi32, #tpu.memory_space<smem>>) -> (i32, i32, i32) {
    %c0_i32 = arith.constant 0 : i32
    %c0_i32_0 = arith.constant 0 : i32
    %c0_i32_1 = arith.constant 0 : i32
    return %arg0, %c0_i32, %c0_i32_0 : i32, i32, i32
  }
  func.func @transform_7(%arg0: i32, %arg1: memref<6x8xi32, #tpu.memory_space<smem>>) -> (i32, i32) {
    %c0_i32 = arith.constant 0 : i32
    %c0_i32_0 = arith.constant 0 : i32
    %c0_i32_1 = arith.constant 0 : i32
    return %c0_i32, %c0_i32_0 : i32, i32
  }
}

</mosaic_0001>

<llo_original>
// kernel: tpu_custom_call.1
$region0: #{tpu_custom_call.1}
  #allocation0 [shape = 'u32[]', space=smem, size = 0x4, offset = 0x4, fixed_abs, tag = 'smem constant byte address 0x4 - core index']
  #allocation1 [shape = 'u32[144,128]{1,0:T(1,128)}', space=vmem, size = 0x12000, scoped, tag = 'internal scratch']
  #allocation2 [shape = 'f32[8,256]{1,0:T(8,128)}', space=vmem, size = 0x2000, scoped, tag = 'scratch operand']
  #allocation3 [shape = 's32[1]{0}', space=sflag, size = 0x4, scoped, tag = 'scoped memory for tpu_custom_call.1']
  #allocation4 [shape = 'u8[4096]{0}', space=smem, size = 0x1000, scoped, tag = 'prefetched SMEM operand 0']
  %s0 = inlined_call_operand.hbm [shape: s32[6,8], index: 0, kind: input, shape index: {}]
  %s1 = inlined_call_operand.hbm [shape: f32[8,128], index: 1, kind: input, shape index: {}]
  %s2 = inlined_call_operand.hbm [shape: f32[64,128], index: 2, kind: input, shape index: {}]
  %s3 = inlined_call_operand.hbm [shape: bf16[256,512], index: 3, kind: input, shape index: {}]
  %s4 = inlined_call_operand.vmem [shape: f32[4,128], index: 4, kind: input, shape index: {}]
  %s5 = inlined_call_operand.hbm [shape: bf16[128,128], index: 5, kind: input, shape index: {}]
  %s6 = inlined_call_operand.vmem [shape: f32[1,128], index: 6, kind: input, shape index: {}]
  %s7 = inlined_call_operand.hbm [shape: f32[6,8,128], index: 7, kind: output, shape index: {0}]
  %s8 = inlined_call_operand.hbm [shape: f32[8,128], index: 8, kind: output, shape index: {1}]
  %9 = xla_tuple %s7, %s8
  %s10 = sld [smem:[#allocation0]]
  $region85: #{tpu_custom_call.1} parent=0
    _
  %s12 = ssub.s32 1, %s10
  %s13 = scalar_select 0, %s12, %s10
  %15 = dma.hbm_to_smem %s0, 128, [#allocation4], [#allocation3]
  %16 = dma.done [#allocation3], 128
  %17 = sfence
  $region1: #{tpu_custom_call.1} parent=0
    #allocation5 [shape = 'u8[4096]{0}', space=vmem, size = 0x1000, scoped, tag = 'input window, operand 1, single buffered']
    #allocation6 [shape = 's32[2]{0}', space=sflag, size = 0x8, scoped, tag = 'scoped memory for tpu_custom_call.1']
    #allocation7 [shape = 's32[2]{0}', space=sflag, size = 0x8, scoped, tag = 'scoped memory for tpu_custom_call.1']
    #allocation8 [shape = 'u8[32768]{0}', space=vmem, size = 0x8000, scoped, tag = 'input window, operand 2, single buffered']
    #allocation9 [shape = 's32[1]{0}', space=sflag, size = 0x4, scoped, tag = 'scoped memory for tpu_custom_call.1']
    #allocation10 [shape = 'u8[262144]{0}', space=vmem, size = 0x40000, scoped, tag = 'input window, operand 3, single buffered']
    #allocation11 [shape = 'u8[32768]{0}', space=vmem, size = 0x8000, scoped, tag = 'input window, operand 5, single buffered']
    #allocation12 [shape = 's32[1]{0}', space=sflag, size = 0x4, scoped, tag = 'scoped memory for tpu_custom_call.1']
    #allocation13 [shape = 'u8[8192]{0}', space=vmem, size = 0x2000, scoped, tag = 'output window, operand 0']
    #allocation14 [shape = 'u8[4096]{0}', space=vmem, size = 0x1000, scoped, tag = 'output window, operand 1, single buffered']
    #allocation15 [shape = 's32[1]{0}', space=sflag, size = 0x4, scoped, tag = 'scoped memory for tpu_custom_call.1']
    %18 = vsyncpa [#allocation6], 0
    %19 = vsyncpa [#allocation9], 0
    %20 = vsyncpa [#allocation12], 0
    %21 = vsyncpa [#allocation7], 0
    %s22 = scalar_lea.sflag [#allocation7], 1
    %23 = vsyncpa %s22, 0
    %24 = vsyncpa [#allocation15], 0
    loop: start=0, step=1, limit=8
    $region2: #{tpu_custom_call.1} parent=1 // loop_pre_header
      _
    $region3: #{tpu_custom_call.1} parent=1 // loop_header
      %s26 = sphi 0, %s30
      %p27 = scmp.ge.s32.totalorder %s26, 8
      %s34 = sphi 0, %s34
      %s36 = sphi 0, %s34
      %s37 = sphi 0, %s36
      %s51 = sphi 0, %s37
      %s55 = sphi 0, %s55
      %s57 = sphi 0, %s55
      %s58 = sphi 0, %s57
      %s72 = sphi 0, %s58
      %s76 = sphi 0, %s76
      %s78 = sphi 0, %s76
      %s79 = sphi 0, %s78
      %s93 = sphi 0, %s79
      %s97 = sphi 0, %s97
      %s99 = sphi 0, %s97
      %s100 = sphi 0, %s99
      %s114 = sphi 0, %s100
      %s118 = sphi 0, %s118
      %s120 = sphi 0, %s118
      %s121 = sphi 0, %s120
      %s135 = sphi 0, %s121
      %s139 = sphi 0, %s139
      %s141 = sphi 0, %s139
      %s142 = sphi 0, %s141
      %s156 = sphi 0, %s142
      %s162 = sphi 0, %s164
      %s165 = sphi 0, %s162
      %s166 = sphi 0, %s165
      %s182 = sphi 0, %s166
      %s186 = sphi 0, %s186
      %s188 = sphi 0, %s186
      %s189 = sphi 0, %s188
      %s203 = sphi 0, %s189
    $region4: #{tpu_custom_call.1} parent=1 // loop_header_branch
      %29 = sbr.rel (%p27) target = $region8
    $region5: #{tpu_custom_call.1} parent=1 // loop_body
      %s31 = ssub.s32 %s26, 1
      %s32 = ssub.s32 %s26, 2
      %s33 = sadd.s32 %s26, 1
      %s35 = sadd.s32 %s34, 1
      %p38 = scmp.eq.s32.totalorder %s26, 5
      %p39 = scmp.ne.s32.totalorder %s34, %s36
      %p40 = scmp.eq.s32.totalorder %s26, 0
      %p41 = por %p39, %p40
      %p42 = scmp.ne.s32.totalorder %s34, %s36
      %p43 = scmp.eq.s32.totalorder %s31, 5
      %p44 = por %p42, %p43
      %p45 = scmp.ne.s32.totalorder %s36, %s37
      %p46 = scmp.eq.s32.totalorder %s31, 0
      %p47 = por %p45, %p46
      %p48 = scmp.ne.s32.totalorder %s36, %s37
      %p49 = scmp.eq.s32.totalorder %s32, 5
      %p50 = por %p48, %p49
      %p52 = scmp.ne.s32.totalorder %s37, %s51
      %p53 = scmp.eq.s32.totalorder %s32, 0
      %p54 = por %p52, %p53
      %s56 = sadd.s32 %s55, 1
      %p59 = scmp.eq.s32.totalorder %s26, 5
      %p60 = scmp.ne.s32.totalorder %s55, %s57
      %p61 = scmp.eq.s32.totalorder %s26, 0
      %p62 = por %p60, %p61
      %p63 = scmp.ne.s32.totalorder %s55, %s57
      %p64 = scmp.eq.s32.totalorder %s31, 5
      %p65 = por %p63, %p64
      %p66 = scmp.ne.s32.totalorder %s57, %s58
      %p67 = scmp.eq.s32.totalorder %s31, 0
      %p68 = por %p66, %p67
      %p69 = scmp.ne.s32.totalorder %s57, %s58
      %p70 = scmp.eq.s32.totalorder %s32, 5
      %p71 = por %p69, %p70
      %p73 = scmp.ne.s32.totalorder %s58, %s72
      %p74 = scmp.eq.s32.totalorder %s32, 0
      %p75 = por %p73, %p74
      %s77 = sadd.s32 %s76, 1
      %p80 = scmp.eq.s32.totalorder %s26, 5
      %p81 = scmp.ne.s32.totalorder %s76, %s78
      %p82 = scmp.eq.s32.totalorder %s26, 0
      %p83 = por %p81, %p82
      %p84 = scmp.ne.s32.totalorder %s76, %s78
      %p85 = scmp.eq.s32.totalorder %s31, 5
      %p86 = por %p84, %p85
      %p87 = scmp.ne.s32.totalorder %s78, %s79
      %p88 = scmp.eq.s32.totalorder %s31, 0
      %p89 = por %p87, %p88
      %p90 = scmp.ne.s32.totalorder %s78, %s79
      %p91 = scmp.eq.s32.totalorder %s32, 5
      %p92 = por %p90, %p91
      %p94 = scmp.ne.s32.totalorder %s79, %s93
      %p95 = scmp.eq.s32.totalorder %s32, 0
      %p96 = por %p94, %p95
      %s98 = sadd.s32 %s97, 1
      %p101 = scmp.eq.s32.totalorder %s26, 5
      %p102 = scmp.ne.s32.totalorder %s97, %s99
      %p103 = scmp.eq.s32.totalorder %s26, 0
      %p104 = por %p102, %p103
      %p105 = scmp.ne.s32.totalorder %s97, %s99
      %p106 = scmp.eq.s32.totalorder %s31, 5
      %p107 = por %p105, %p106
      %p108 = scmp.ne.s32.totalorder %s99, %s100
      %p109 = scmp.eq.s32.totalorder %s31, 0
      %p110 = por %p108, %p109
      %p111 = scmp.ne.s32.totalorder %s99, %s100
      %p112 = scmp.eq.s32.totalorder %s32, 5
      %p113 = por %p111, %p112
      %p115 = scmp.ne.s32.totalorder %s100, %s114
      %p116 = scmp.eq.s32.totalorder %s32, 0
      %p117 = por %p115, %p116
      %s119 = sadd.s32 %s118, 1
      %p122 = scmp.eq.s32.totalorder %s26, 5
      %p123 = scmp.ne.s32.totalorder %s118, %s120
      %p124 = scmp.eq.s32.totalorder %s26, 0
      %p125 = por %p123, %p124
      %p126 = scmp.ne.s32.totalorder %s118, %s120
      %p127 = scmp.eq.s32.totalorder %s31, 5
      %p128 = por %p126, %p127
      %p129 = scmp.ne.s32.totalorder %s120, %s121
      %p130 = scmp.eq.s32.totalorder %s31, 0
      %p131 = por %p129, %p130
      %p132 = scmp.ne.s32.totalorder %s120, %s121
      %p133 = scmp.eq.s32.totalorder %s32, 5
      %p134 = por %p132, %p133
      %p136 = scmp.ne.s32.totalorder %s121, %s135
      %p137 = scmp.eq.s32.totalorder %s32, 0
      %p138 = por %p136, %p137
      %s140 = sadd.s32 %s139, 1
      %p143 = scmp.eq.s32.totalorder %s26, 5
      %p144 = scmp.ne.s32.totalorder %s139, %s141
      %p145 = scmp.eq.s32.totalorder %s26, 0
      %p146 = por %p144, %p145
      %p147 = scmp.ne.s32.totalorder %s139, %s141
      %p148 = scmp.eq.s32.totalorder %s31, 5
      %p149 = por %p147, %p148
      %p150 = scmp.ne.s32.totalorder %s141, %s142
      %p151 = scmp.eq.s32.totalorder %s31, 0
      %p152 = por %p150, %p151
      %p153 = scmp.ne.s32.totalorder %s141, %s142
      %p154 = scmp.eq.s32.totalorder %s32, 5
      %p155 = por %p153, %p154
      %p157 = scmp.ne.s32.totalorder %s142, %s156
      %p158 = scmp.eq.s32.totalorder %s32, 0
      %p159 = por %p157, %p158
      %s160 = ssub.s32 %s26, %s33
      %p161 = scmp.eq.s32.totalorder %s160, 0
      %s163 = sadd.s32 %s162, 1
      %s164 = scalar_select %p161, %s162, %s163
      %p167 = pneg %p161
      %p168 = scmp.eq.s32.totalorder %s26, 5
      %p169 = por %p167, %p168
      %p170 = scmp.ne.s32.totalorder %s162, %s165
      %p171 = scmp.eq.s32.totalorder %s26, 0
      %p172 = por %p170, %p171
      %p173 = scmp.ne.s32.totalorder %s162, %s165
      %p174 = scmp.eq.s32.totalorder %s31, 5
      %p175 = por %p173, %p174
      %p176 = scmp.ne.s32.totalorder %s165, %s166
      %p177 = scmp.eq.s32.totalorder %s31, 0
      %p178 = por %p176, %p177
      %p179 = scmp.ne.s32.totalorder %s165, %s166
      %p180 = scmp.eq.s32.totalorder %s32, 5
      %p181 = por %p179, %p180
      %p183 = scmp.ne.s32.totalorder %s166, %s182
      %p184 = scmp.eq.s32.totalorder %s32, 0
      %p185 = por %p183, %p184
      %s187 = sadd.s32 %s186, 1
      %p190 = scmp.eq.s32.totalorder %s26, 5
      %p191 = scmp.ne.s32.totalorder %s186, %s188
      %p192 = scmp.eq.s32.totalorder %s26, 0
      %p193 = por %p191, %p192
      %p194 = scmp.ne.s32.totalorder %s186, %s188
      %p195 = scmp.eq.s32.totalorder %s31, 5
      %p196 = por %p194, %p195
      %p197 = scmp.ne.s32.totalorder %s188, %s189
      %p198 = scmp.eq.s32.totalorder %s31, 0
      %p199 = por %p197, %p198
      %p200 = scmp.ne.s32.totalorder %s188, %s189
      %p201 = scmp.eq.s32.totalorder %s32, 5
      %p202 = por %p200, %p201
      %p204 = scmp.ne.s32.totalorder %s189, %s203
      %p205 = scmp.eq.s32.totalorder %s32, 0
      %p206 = por %p204, %p205
      %p207 = scmp.le.s32.totalorder 1, %s26
      %p208 = scmp.lt.s32.totalorder %s26, 7
      %p209 = pnand %p207, %p208
      %p210 = pneg %p209
      // Predicated region
      $region9: #{tpu_custom_call.1} parent=5 // pred_check
        _
      $region10: #{tpu_custom_call.1} parent=5 // pred_check_branch
        %212 = sbr.rel (%p209) target = $region12
      $region11: #{tpu_custom_call.1} parent=5 // pred_region
        %s213 = ssub.s32 %s26, 1
        // Predicated region
        $region13: #{tpu_custom_call.1} parent=11 // pred_check
          %p214 = pneg %p47
        $region14: #{tpu_custom_call.1} parent=11 // pred_check_branch
          %216 = sbr.rel (%p214) target = $region16
        $region15: #{tpu_custom_call.1} parent=11 // pred_region
          %s218 = ssub.s32 128, 128
          %219 = vsyncadd [#allocation6], %s218
          %s221 = sshll.u32 [#allocation5], 4
          %s222 = int_to_ptr.vmem [resolvable:$true] %s221
          %224 = dma.hbm_to_vmem [thread:$0]  %s1, 128, %s222, [#allocation6]
        $region16: #{tpu_custom_call.1} parent=11 // pred_fallthru
          _
        // Predicated region
        $region17: #{tpu_custom_call.1} parent=11 // pred_check
          %p225 = pneg %p68
        $region18: #{tpu_custom_call.1} parent=11 // pred_check_branch
          %227 = sbr.rel (%p225) target = $region20
        $region19: #{tpu_custom_call.1} parent=11 // pred_region
          %s229 = ssub.s32 1024, 1024
          %230 = vsyncadd [#allocation9], %s229
          %s231 = sshll.u32 [#allocation8], 4
          %s232 = int_to_ptr.vmem [resolvable:$true] %s231
          %237 = dma.hbm_to_vmem [thread:$0]  %s2, 1024, %s232, [#allocation9], 128, 128, 8
        $region20: #{tpu_custom_call.1} parent=11 // pred_fallthru
          _
        // Predicated region
        $region21: #{tpu_custom_call.1} parent=11 // pred_check
          %p238 = pneg %p89
        $region22: #{tpu_custom_call.1} parent=11 // pred_check_branch
          %240 = sbr.rel (%p238) target = $region24
        $region23: #{tpu_custom_call.1} parent=11 // pred_region
          %s242 = ssub.s32 8192, 8192
          %243 = vsyncadd [#allocation9], %s242
          %s244 = sshll.u32 [#allocation10], 4
          %s245 = int_to_ptr.vmem [resolvable:$true] %s244
          %250 = dma.hbm_to_vmem [thread:$0]  %s3, 8192, %s245, [#allocation9], 256, 256, 16
        $region24: #{tpu_custom_call.1} parent=11 // pred_fallthru
          _
        // Predicated region
        $region25: #{tpu_custom_call.1} parent=11 // pred_check
          %p251 = pneg %p110
        $region26: #{tpu_custom_call.1} parent=11 // pred_check_branch
          %253 = sbr.rel (%p251) target = $region28
        $region27: #{tpu_custom_call.1} parent=11 // pred_region
          _
        $region28: #{tpu_custom_call.1} parent=11 // pred_fallthru
          _
        // Predicated region
        $region29: #{tpu_custom_call.1} parent=11 // pred_check
          %p254 = pneg %p131
        $region30: #{tpu_custom_call.1} parent=11 // pred_check_branch
          %256 = sbr.rel (%p254) target = $region32
        $region31: #{tpu_custom_call.1} parent=11 // pred_region
          %s258 = ssub.s32 1024, 1024
          %259 = vsyncadd [#allocation12], %s258
          %s260 = sshll.u32 [#allocation11], 4
          %s261 = int_to_ptr.vmem [resolvable:$true] %s260
          %266 = dma.hbm_to_vmem [thread:$0]  %s5, 1024, %s261, [#allocation12], 64, 64, 4
        $region32: #{tpu_custom_call.1} parent=11 // pred_fallthru
          _
        // Predicated region
        $region33: #{tpu_custom_call.1} parent=11 // pred_check
          %p267 = pneg %p152
        $region34: #{tpu_custom_call.1} parent=11 // pred_check_branch
          %269 = sbr.rel (%p267) target = $region36
        $region35: #{tpu_custom_call.1} parent=11 // pred_region
          _
        $region36: #{tpu_custom_call.1} parent=11 // pred_fallthru
          _
      $region12: #{tpu_custom_call.1} parent=5 // pred_fallthru
        _
      %p270 = scmp.lt.s32.totalorder %s26, 6
      // Predicated region
      $region37: #{tpu_custom_call.1} parent=5 // pred_check
        %p271 = pneg %p270
      $region38: #{tpu_custom_call.1} parent=5 // pred_check_branch
        %273 = sbr.rel (%p271) target = $region40
      $region39: #{tpu_custom_call.1} parent=5 // pred_region
        _
      $region40: #{tpu_custom_call.1} parent=5 // pred_fallthru
        _
      %p274 = scmp.le.s32.totalorder 1, %s26
      %p275 = scmp.lt.s32.totalorder %s26, 7
      %p276 = pnand %p274, %p275
      %p277 = pneg %p276
      // Predicated region
      $region41: #{tpu_custom_call.1} parent=5 // pred_check
        _
      $region42: #{tpu_custom_call.1} parent=5 // pred_check_branch
        %279 = sbr.rel (%p276) target = $region44
      $region43: #{tpu_custom_call.1} parent=5 // pred_region
        %s280 = ssub.s32 %s26, 1
        // Predicated region
        $region45: #{tpu_custom_call.1} parent=43 // pred_check
          %p281 = pneg %p47
        $region46: #{tpu_custom_call.1} parent=43 // pred_check_branch
          %283 = sbr.rel (%p281) target = $region48
        $region47: #{tpu_custom_call.1} parent=43 // pred_region
          %284 = dma.done [#allocation6], 128
        $region48: #{tpu_custom_call.1} parent=43 // pred_fallthru
          _
        // Predicated region
        $region49: #{tpu_custom_call.1} parent=43 // pred_check
          %p285 = pneg %p68
        $region50: #{tpu_custom_call.1} parent=43 // pred_check_branch
          %287 = sbr.rel (%p285) target = $region52
        $region51: #{tpu_custom_call.1} parent=43 // pred_region
          %288 = dma.done [#allocation9], 1024
        $region52: #{tpu_custom_call.1} parent=43 // pred_fallthru
          _
        // Predicated region
        $region53: #{tpu_custom_call.1} parent=43 // pred_check
          %p289 = pneg %p89
        $region54: #{tpu_custom_call.1} parent=43 // pred_check_branch
          %291 = sbr.rel (%p289) target = $region56
        $region55: #{tpu_custom_call.1} parent=43 // pred_region
          %292 = dma.done [#allocation9], 8192
        $region56: #{tpu_custom_call.1} parent=43 // pred_fallthru
          _
        // Predicated region
        $region57: #{tpu_custom_call.1} parent=43 // pred_check
          %p293 = pneg %p131
        $region58: #{tpu_custom_call.1} parent=43 // pred_check_branch
          %295 = sbr.rel (%p293) target = $region60
        $region59: #{tpu_custom_call.1} parent=43 // pred_region
          %296 = dma.done [#allocation12], 1024
        $region60: #{tpu_custom_call.1} parent=43 // pred_fallthru
          _
        %p297 = pneg %p47
        %p298 = pneg %p44
        %p299 = pneg %p68
        %p300 = pneg %p65
        %p301 = pneg %p89
        %p302 = pneg %p86
        %p303 = pneg %p110
        %p304 = pneg %p107
        %p305 = pneg %p131
        %p306 = pneg %p128
        %p307 = pneg %p152
        %p308 = pneg %p149
        %p309 = pneg %p178
        %p310 = pneg %p175
        %s311 = sand.u32 %s165, 1
        %s312 = scalar_lea.sflag [#allocation7], %s311
        %s313 = sand.u32 %s165, 1
        %s314 = smul.addr %s313, 8
        %s315 = scalar_lea.vmem [#allocation13], %s314
        %p316 = pneg %p199
        %p317 = pneg %p196
        %p319 = scmp.eq.s32.totalorder %s31, 0
        // Predicated region
        $region61: #{tpu_custom_call.1} parent=43 // pred_check
          %p320 = pneg %p319
        $region62: #{tpu_custom_call.1} parent=43 // pred_check_branch
          %322 = sbr.rel (%p320) target = $region64
        $region63: #{tpu_custom_call.1} parent=43 // pred_region
          %v323 = vld [vmem:[#allocation5] sm:$0xff]
          %324 = vst [vmem:[#allocation2 + $0x8] sm:$0xff] %v323
        $region64: #{tpu_custom_call.1} parent=43 // pred_fallthru
          _
        %s325 = smul.u32 %s31, 128
        %s326 = sld [smem:[#allocation4 + %s325]]
        %s327 = scalar_lea.vmem [#allocation8], %s326
        %v328 = vld [vmem:[%s327] sm:$0x1]
        %329 = vst [vmem:[#allocation2] sm:$0x1] %v328
        %s330 = sadd.s32 %s325, 1
        %s331 = sld [smem:[#allocation4 + %s330]]
        %s332 = scalar_lea.vmem [#allocation8], %s331
        %v333 = vld [vmem:[%s332] sm:$0x1]
        %334 = vst [vmem:[#allocation2 + $0x1] sm:$0x1] %v333
        %s335 = sadd.s32 %s325, 2
        %s336 = sld [smem:[#allocation4 + %s335]]
        %s337 = scalar_lea.vmem [#allocation8], %s336
        %v338 = vld [vmem:[%s337] sm:$0x1]
        %339 = vst [vmem:[#allocation2 + $0x2] sm:$0x1] %v338
        %s340 = sadd.s32 %s325, 3
        %s341 = sld [smem:[#allocation4 + %s340]]
        %s342 = scalar_lea.vmem [#allocation8], %s341
        %v343 = vld [vmem:[%s342] sm:$0x1]
        %344 = vst [vmem:[#allocation2 + $0x3] sm:$0x1] %v343
        %s345 = sadd.s32 %s325, 4
        %s346 = sld [smem:[#allocation4 + %s345]]
        %s347 = scalar_lea.vmem [#allocation8], %s346
        %v348 = vld [vmem:[%s347] sm:$0x1]
        %349 = vst [vmem:[#allocation2 + $0x4] sm:$0x1] %v348
        %s350 = sadd.s32 %s325, 5
        %s351 = sld [smem:[#allocation4 + %s350]]
        %s352 = scalar_lea.vmem [#allocation8], %s351
        %v353 = vld [vmem:[%s352] sm:$0x1]
        %354 = vst [vmem:[#allocation2 + $0x5] sm:$0x1] %v353
        %s355 = sadd.s32 %s325, 6
        %s356 = sld [smem:[#allocation4 + %s355]]
        %s357 = scalar_lea.vmem [#allocation8], %s356
        %v358 = vld [vmem:[%s357] sm:$0x1]
        %359 = vst [vmem:[#allocation2 + $0x6] sm:$0x1] %v358
        %s360 = sadd.s32 %s325, 7
        %s361 = sld [smem:[#allocation4 + %s360]]
        %s362 = scalar_lea.vmem [#allocation8], %s361
        %v363 = vld [vmem:[%s362] sm:$0x1]
        %364 = vst [vmem:[#allocation2 + $0x7] sm:$0x1] %v363
        %v365 = vld [vmem:[#allocation2 + $0x8] sm:$0xff]
        %v366 = vld [vmem:[#allocation2] sm:$0xff]
        %v367 = vpack.c.bf16 %v366, %v366
        %v368 = vpack.c.bf16 %v365, %v365
        %v369 = vld [vmem:[#allocation10] sm:$0xff]
        %v370 = vld [vmem:[#allocation10 + $0x8] sm:$0xff]
        %v371 = vld [vmem:[#allocation10 + $0x10] sm:$0xff]
        %v372 = vld [vmem:[#allocation10 + $0x18] sm:$0xff]
        %v373 = vld [vmem:[#allocation10 + $0x20] sm:$0xff]
        %v374 = vld [vmem:[#allocation10 + $0x28] sm:$0xff]
        %v375 = vld [vmem:[#allocation10 + $0x30] sm:$0xff]
        %v376 = vld [vmem:[#allocation10 + $0x38] sm:$0xff]
        %v377 = vld [vmem:[#allocation10 + $0x40] sm:$0xff]
        %v378 = vld [vmem:[#allocation10 + $0x48] sm:$0xff]
        %v379 = vld [vmem:[#allocation10 + $0x50] sm:$0xff]
        %v380 = vld [vmem:[#allocation10 + $0x58] sm:$0xff]
        %v381 = vld [vmem:[#allocation10 + $0x60] sm:$0xff]
        %v382 = vld [vmem:[#allocation10 + $0x68] sm:$0xff]
        %v383 = vld [vmem:[#allocation10 + $0x70] sm:$0xff]
        %v384 = vld [vmem:[#allocation10 + $0x78] sm:$0xff]
        %v385 = vld [vmem:[#allocation10 + $0x80] sm:$0xff]
        %v386 = vld [vmem:[#allocation10 + $0x88] sm:$0xff]
        %v387 = vld [vmem:[#allocation10 + $0x90] sm:$0xff]
        %v388 = vld [vmem:[#allocation10 + $0x98] sm:$0xff]
        %v389 = vld [vmem:[#allocation10 + $0xa0] sm:$0xff]
        %v390 = vld [vmem:[#allocation10 + $0xa8] sm:$0xff]
        %v391 = vld [vmem:[#allocation10 + $0xb0] sm:$0xff]
        %v392 = vld [vmem:[#allocation10 + $0xb8] sm:$0xff]
        %v393 = vld [vmem:[#allocation10 + $0xc0] sm:$0xff]
        %v394 = vld [vmem:[#allocation10 + $0xc8] sm:$0xff]
        %v395 = vld [vmem:[#allocation10 + $0xd0] sm:$0xff]
        %v396 = vld [vmem:[#allocation10 + $0xd8] sm:$0xff]
        %v397 = vld [vmem:[#allocation10 + $0xe0] sm:$0xff]
        %v398 = vld [vmem:[#allocation10 + $0xe8] sm:$0xff]
        %v399 = vld [vmem:[#allocation10 + $0xf0] sm:$0xff]
        %v400 = vld [vmem:[#allocation10 + $0xf8] sm:$0xff]
        %v401 = vld [vmem:[#allocation10 + $0x100] sm:$0xff]
        %v402 = vld [vmem:[#allocation10 + $0x108] sm:$0xff]
        %v403 = vld [vmem:[#allocation10 + $0x110] sm:$0xff]
        %v404 = vld [vmem:[#allocation10 + $0x118] sm:$0xff]
        %v405 = vld [vmem:[#allocation10 + $0x120] sm:$0xff]
        %v406 = vld [vmem:[#allocation10 + $0x128] sm:$0xff]
        %v407 = vld [vmem:[#allocation10 + $0x130] sm:$0xff]
        %v408 = vld [vmem:[#allocation10 + $0x138] sm:$0xff]
        %v409 = vld [vmem:[#allocation10 + $0x140] sm:$0xff]
        %v410 = vld [vmem:[#allocation10 + $0x148] sm:$0xff]
        %v411 = vld [vmem:[#allocation10 + $0x150] sm:$0xff]
        %v412 = vld [vmem:[#allocation10 + $0x158] sm:$0xff]
        %v413 = vld [vmem:[#allocation10 + $0x160] sm:$0xff]
        %v414 = vld [vmem:[#allocation10 + $0x168] sm:$0xff]
        %v415 = vld [vmem:[#allocation10 + $0x170] sm:$0xff]
        %v416 = vld [vmem:[#allocation10 + $0x178] sm:$0xff]
        %v417 = vld [vmem:[#allocation10 + $0x180] sm:$0xff]
        %v418 = vld [vmem:[#allocation10 + $0x188] sm:$0xff]
        %v419 = vld [vmem:[#allocation10 + $0x190] sm:$0xff]
        %v420 = vld [vmem:[#allocation10 + $0x198] sm:$0xff]
        %v421 = vld [vmem:[#allocation10 + $0x1a0] sm:$0xff]
        %v422 = vld [vmem:[#allocation10 + $0x1a8] sm:$0xff]
        %v423 = vld [vmem:[#allocation10 + $0x1b0] sm:$0xff]
        %v424 = vld [vmem:[#allocation10 + $0x1b8] sm:$0xff]
        %v425 = vld [vmem:[#allocation10 + $0x1c0] sm:$0xff]
        %v426 = vld [vmem:[#allocation10 + $0x1c8] sm:$0xff]
        %v427 = vld [vmem:[#allocation10 + $0x1d0] sm:$0xff]
        %v428 = vld [vmem:[#allocation10 + $0x1d8] sm:$0xff]
        %v429 = vld [vmem:[#allocation10 + $0x1e0] sm:$0xff]
        %v430 = vld [vmem:[#allocation10 + $0x1e8] sm:$0xff]
        %v431 = vld [vmem:[#allocation10 + $0x1f0] sm:$0xff]
        %v432 = vld [vmem:[#allocation10 + $0x1f8] sm:$0xff]
        %v497 = vunpack.c.l.b16 %v369
        %v498 = vunpack.c.h.b16 %v369
        %v499 = vunpack.c.l.b16 %v370
        %v500 = vunpack.c.h.b16 %v370
        %v501 = vunpack.c.l.b16 %v371
        %v502 = vunpack.c.h.b16 %v371
        %v503 = vunpack.c.l.b16 %v372
        %v504 = vunpack.c.h.b16 %v372
        %v505 = vunpack.c.l.b16 %v373
        %v506 = vunpack.c.h.b16 %v373
        %v507 = vunpack.c.l.b16 %v374
        %v508 = vunpack.c.h.b16 %v374
        %v509 = vunpack.c.l.b16 %v375
        %v510 = vunpack.c.h.b16 %v375
        %v511 = vunpack.c.l.b16 %v376
        %v512 = vunpack.c.h.b16 %v376
        %v513 = vunpack.c.l.b16 %v377
        %v514 = vunpack.c.h.b16 %v377
        %v515 = vunpack.c.l.b16 %v378
        %v516 = vunpack.c.h.b16 %v378
        %v517 = vunpack.c.l.b16 %v379
        %v518 = vunpack.c.h.b16 %v379
        %v519 = vunpack.c.l.b16 %v380
        %v520 = vunpack.c.h.b16 %v380
        %v521 = vunpack.c.l.b16 %v381
        %v522 = vunpack.c.h.b16 %v381
        %v523 = vunpack.c.l.b16 %v382
        %v524 = vunpack.c.h.b16 %v382
        %v525 = vunpack.c.l.b16 %v383
        %v526 = vunpack.c.h.b16 %v383
        %v527 = vunpack.c.l.b16 %v384
        %v528 = vunpack.c.h.b16 %v384
        %v529 = vunpack.c.l.b16 %v385
        %v530 = vunpack.c.h.b16 %v385
        %v531 = vunpack.c.l.b16 %v386
        %v532 = vunpack.c.h.b16 %v386
        %v533 = vunpack.c.l.b16 %v387
        %v534 = vunpack.c.h.b16 %v387
        %v535 = vunpack.c.l.b16 %v388
        %v536 = vunpack.c.h.b16 %v388
        %v537 = vunpack.c.l.b16 %v389
        %v538 = vunpack.c.h.b16 %v389
        %v539 = vunpack.c.l.b16 %v390
        %v540 = vunpack.c.h.b16 %v390
        %v541 = vunpack.c.l.b16 %v391
        %v542 = vunpack.c.h.b16 %v391
        %v543 = vunpack.c.l.b16 %v392
        %v544 = vunpack.c.h.b16 %v392
        %v545 = vunpack.c.l.b16 %v393
        %v546 = vunpack.c.h.b16 %v393
        %v547 = vunpack.c.l.b16 %v394
        %v548 = vunpack.c.h.b16 %v394
        %v549 = vunpack.c.l.b16 %v395
        %v550 = vunpack.c.h.b16 %v395
        %v551 = vunpack.c.l.b16 %v396
        %v552 = vunpack.c.h.b16 %v396
        %v553 = vunpack.c.l.b16 %v397
        %v554 = vunpack.c.h.b16 %v397
        %v555 = vunpack.c.l.b16 %v398
        %v556 = vunpack.c.h.b16 %v398
        %v557 = vunpack.c.l.b16 %v399
        %v558 = vunpack.c.h.b16 %v399
        %v559 = vunpack.c.l.b16 %v400
        %v560 = vunpack.c.h.b16 %v400
        %v561 = vunpack.c.l.b16 %v401
        %v562 = vunpack.c.h.b16 %v401
        %v563 = vunpack.c.l.b16 %v402
        %v564 = vunpack.c.h.b16 %v402
        %v565 = vunpack.c.l.b16 %v403
        %v566 = vunpack.c.h.b16 %v403
        %v567 = vunpack.c.l.b16 %v404
        %v568 = vunpack.c.h.b16 %v404
        %v569 = vunpack.c.l.b16 %v405
        %v570 = vunpack.c.h.b16 %v405
        %v571 = vunpack.c.l.b16 %v406
        %v572 = vunpack.c.h.b16 %v406
        %v573 = vunpack.c.l.b16 %v407
        %v574 = vunpack.c.h.b16 %v407
        %v575 = vunpack.c.l.b16 %v408
        %v576 = vunpack.c.h.b16 %v408
        %v577 = vunpack.c.l.b16 %v409
        %v578 = vunpack.c.h.b16 %v409
        %v579 = vunpack.c.l.b16 %v410
        %v580 = vunpack.c.h.b16 %v410
        %v581 = vunpack.c.l.b16 %v411
        %v582 = vunpack.c.h.b16 %v411
        %v583 = vunpack.c.l.b16 %v412
        %v584 = vunpack.c.h.b16 %v412
        %v585 = vunpack.c.l.b16 %v413
        %v586 = vunpack.c.h.b16 %v413
        %v587 = vunpack.c.l.b16 %v414
        %v588 = vunpack.c.h.b16 %v414
        %v589 = vunpack.c.l.b16 %v415
        %v590 = vunpack.c.h.b16 %v415
        %v591 = vunpack.c.l.b16 %v416
        %v592 = vunpack.c.h.b16 %v416
        %v593 = vunpack.c.l.b16 %v417
        %v594 = vunpack.c.h.b16 %v417
        %v595 = vunpack.c.l.b16 %v418
        %v596 = vunpack.c.h.b16 %v418
        %v597 = vunpack.c.l.b16 %v419
        %v598 = vunpack.c.h.b16 %v419
        %v599 = vunpack.c.l.b16 %v420
        %v600 = vunpack.c.h.b16 %v420
        %v601 = vunpack.c.l.b16 %v421
        %v602 = vunpack.c.h.b16 %v421
        %v603 = vunpack.c.l.b16 %v422
        %v604 = vunpack.c.h.b16 %v422
        %v605 = vunpack.c.l.b16 %v423
        %v606 = vunpack.c.h.b16 %v423
        %v607 = vunpack.c.l.b16 %v424
        %v608 = vunpack.c.h.b16 %v424
        %v609 = vunpack.c.l.b16 %v425
        %v610 = vunpack.c.h.b16 %v425
        %v611 = vunpack.c.l.b16 %v426
        %v612 = vunpack.c.h.b16 %v426
        %v613 = vunpack.c.l.b16 %v427
        %v614 = vunpack.c.h.b16 %v427
        %v615 = vunpack.c.l.b16 %v428
        %v616 = vunpack.c.h.b16 %v428
        %v617 = vunpack.c.l.b16 %v429
        %v618 = vunpack.c.h.b16 %v429
        %v619 = vunpack.c.l.b16 %v430
        %v620 = vunpack.c.h.b16 %v430
        %v621 = vunpack.c.l.b16 %v431
        %v622 = vunpack.c.h.b16 %v431
        %v623 = vunpack.c.l.b16 %v432
        %v624 = vunpack.c.h.b16 %v432
        %v625 = vpack.c.b16 %v501, %v497
        %v626 = vpack.c.b16 %v502, %v498
        %v627 = vpack.c.b16 %v503, %v499
        %v628 = vpack.c.b16 %v504, %v500
        %v629 = vpack.c.b16 %v509, %v505
        %v630 = vpack.c.b16 %v510, %v506
        %v631 = vpack.c.b16 %v511, %v507
        %v632 = vpack.c.b16 %v512, %v508
        %v633 = vpack.c.b16 %v517, %v513
        %v634 = vpack.c.b16 %v518, %v514
        %v635 = vpack.c.b16 %v519, %v515
        %v636 = vpack.c.b16 %v520, %v516
        %v637 = vpack.c.b16 %v525, %v521
        %v638 = vpack.c.b16 %v526, %v522
        %v639 = vpack.c.b16 %v527, %v523
        %v640 = vpack.c.b16 %v528, %v524
        %v641 = vpack.c.b16 %v533, %v529
        %v642 = vpack.c.b16 %v534, %v530
        %v643 = vpack.c.b16 %v535, %v531
        %v644 = vpack.c.b16 %v536, %v532
        %v645 = vpack.c.b16 %v541, %v537
        %v646 = vpack.c.b16 %v542, %v538
        %v647 = vpack.c.b16 %v543, %v539
        %v648 = vpack.c.b16 %v544, %v540
        %v649 = vpack.c.b16 %v549, %v545
        %v650 = vpack.c.b16 %v550, %v546
        %v651 = vpack.c.b16 %v551, %v547
        %v652 = vpack.c.b16 %v552, %v548
        %v653 = vpack.c.b16 %v557, %v553
        %v654 = vpack.c.b16 %v558, %v554
        %v655 = vpack.c.b16 %v559, %v555
        %v656 = vpack.c.b16 %v560, %v556
        %v657 = vpack.c.b16 %v565, %v561
        %v658 = vpack.c.b16 %v566, %v562
        %v659 = vpack.c.b16 %v567, %v563
        %v660 = vpack.c.b16 %v568, %v564
        %v661 = vpack.c.b16 %v573, %v569
        %v662 = vpack.c.b16 %v574, %v570
        %v663 = vpack.c.b16 %v575, %v571
        %v664 = vpack.c.b16 %v576, %v572
        %v665 = vpack.c.b16 %v581, %v577
        %v666 = vpack.c.b16 %v582, %v578
        %v667 = vpack.c.b16 %v583, %v579
        %v668 = vpack.c.b16 %v584, %v580
        %v669 = vpack.c.b16 %v589, %v585
        %v670 = vpack.c.b16 %v590, %v586
        %v671 = vpack.c.b16 %v591, %v587
        %v672 = vpack.c.b16 %v592, %v588
        %v673 = vpack.c.b16 %v597, %v593
        %v674 = vpack.c.b16 %v598, %v594
        %v675 = vpack.c.b16 %v599, %v595
        %v676 = vpack.c.b16 %v600, %v596
        %v677 = vpack.c.b16 %v605, %v601
        %v678 = vpack.c.b16 %v606, %v602
        %v679 = vpack.c.b16 %v607, %v603
        %v680 = vpack.c.b16 %v608, %v604
        %v681 = vpack.c.b16 %v613, %v609
        %v682 = vpack.c.b16 %v614, %v610
        %v683 = vpack.c.b16 %v615, %v611
        %v684 = vpack.c.b16 %v616, %v612
        %v685 = vpack.c.b16 %v621, %v617
        %v686 = vpack.c.b16 %v622, %v618
        %v687 = vpack.c.b16 %v623, %v619
        %v688 = vpack.c.b16 %v624, %v620
        %753 = vmatprep.subr.bf16.mxu0 %v626
        %754 = vmatpush1.bf16.msra.mxu0 %v625
        %755 = vmatprep.subr.bf16.mxu0 %v630
        %756 = vmatpush1.bf16.msra.mxu0 %v629
        %757 = vmatprep.subr.bf16.mxu0 %v634
        %758 = vmatpush1.bf16.msra.mxu0 %v633
        %759 = vmatprep.subr.bf16.mxu0 %v638
        %760 = vmatpush1.bf16.msra.mxu0 %v637
        %761 = vmatprep.subr.bf16.mxu0 %v642
        %762 = vmatpush1.bf16.msra.mxu0 %v641
        %763 = vmatprep.subr.bf16.mxu0 %v646
        %764 = vmatpush1.bf16.msra.mxu0 %v645
        %765 = vmatprep.subr.bf16.mxu0 %v650
        %766 = vmatpush1.bf16.msra.mxu0 %v649
        %767 = vmatprep.subr.bf16.mxu0 %v654
        %768 = vmatpush1.bf16.msra.mxu0 %v653
        %769 = vmatprep.subr.bf16.mxu0 %v658
        %770 = vmatpush1.bf16.msra.mxu0 %v657
        %771 = vmatprep.subr.bf16.mxu0 %v662
        %772 = vmatpush1.bf16.msra.mxu0 %v661
        %773 = vmatprep.subr.bf16.mxu0 %v666
        %774 = vmatpush1.bf16.msra.mxu0 %v665
        %775 = vmatprep.subr.bf16.mxu0 %v670
        %776 = vmatpush1.bf16.msra.mxu0 %v669
        %777 = vmatprep.subr.bf16.mxu0 %v674
        %778 = vmatpush1.bf16.msra.mxu0 %v673
        %779 = vmatprep.subr.bf16.mxu0 %v678
        %780 = vmatpush1.bf16.msra.mxu0 %v677
        %781 = vmatprep.subr.bf16.mxu0 %v682
        %782 = vmatpush1.bf16.msra.mxu0 %v681
        %783 = vmatprep.subr.bf16.mxu0 %v686
        %784 = vmatpush1.bf16.msra.mxu0 %v685
        %785 = vmatprep.mubr.bf16.mxu0 %v368
        %786 = vmatmul.mubr.bf16.gmra.mrb[0].mxu0 %v367
        %v787 = vpop.f32.mrb[0].mxu0
        %v788 = vadd.f32 0.0, %v787
        %v789 = vpop.f32.mrb[0].mxu0
        %v790 = vadd.f32 0.0, %v789
        %v791 = vpop.f32.mrb[0].mxu0
        %v792 = vpop.f32.mrb[0].mxu0
        %793 = vdwg.mxu0
        %794 = vmatprep.subr.bf16.mxu0 %v628
        %795 = vmatpush1.bf16.msra.mxu0 %v627
        %796 = vmatprep.subr.bf16.mxu0 %v632
        %797 = vmatpush1.bf16.msra.mxu0 %v631
        %798 = vmatprep.subr.bf16.mxu0 %v636
        %799 = vmatpush1.bf16.msra.mxu0 %v635
        %800 = vmatprep.subr.bf16.mxu0 %v640
        %801 = vmatpush1.bf16.msra.mxu0 %v639
        %802 = vmatprep.subr.bf16.mxu0 %v644
        %803 = vmatpush1.bf16.msra.mxu0 %v643
        %804 = vmatprep.subr.bf16.mxu0 %v648
        %805 = vmatpush1.bf16.msra.mxu0 %v647
        %806 = vmatprep.subr.bf16.mxu0 %v652
        %807 = vmatpush1.bf16.msra.mxu0 %v651
        %808 = vmatprep.subr.bf16.mxu0 %v656
        %809 = vmatpush1.bf16.msra.mxu0 %v655
        %810 = vmatprep.subr.bf16.mxu0 %v660
        %811 = vmatpush1.bf16.msra.mxu0 %v659
        %812 = vmatprep.subr.bf16.mxu0 %v664
        %813 = vmatpush1.bf16.msra.mxu0 %v663
        %814 = vmatprep.subr.bf16.mxu0 %v668
        %815 = vmatpush1.bf16.msra.mxu0 %v667
        %816 = vmatprep.subr.bf16.mxu0 %v672
        %817 = vmatpush1.bf16.msra.mxu0 %v671
        %818 = vmatprep.subr.bf16.mxu0 %v676
        %819 = vmatpush1.bf16.msra.mxu0 %v675
        %820 = vmatprep.subr.bf16.mxu0 %v680
        %821 = vmatpush1.bf16.msra.mxu0 %v679
        %822 = vmatprep.subr.bf16.mxu0 %v684
        %823 = vmatpush1.bf16.msra.mxu0 %v683
        %824 = vmatprep.subr.bf16.mxu0 %v688
        %825 = vmatpush1.bf16.msra.mxu0 %v687
        %826 = vmatprep.mubr.bf16.mxu0 %v368
        %827 = vmatmul.mubr.bf16.gmra.mrb[0].mxu0 %v367
        %v828 = vpop.f32.mrb[0].mxu0
        %v829 = vadd.f32 0.0, %v828
        %v830 = vpop.f32.mrb[0].mxu0
        %v831 = vadd.f32 0.0, %v830
        %v832 = vpop.f32.mrb[0].mxu0
        %v833 = vpop.f32.mrb[0].mxu0
        %834 = vdwg.mxu0
        %v835 = vld [vmem:[%s4] sm:$0x1]
        %v836 = vlaneseq
        %v837 = vshrl.u32 %v836, 7
        %v838 = vsub.s32 0, %v837
        %v839 = vrot.slane %v835, %v838
        %v840 = vadd.f32 %v788, %v839
        %v841 = vxor.u32 %v840, 2147483648
        %v842 = vmul.f32 %v841, 1.442695
        %v843 = vpow.pop %v842
        %v844 = vadd.f32 %v843, 1.0
        %v845 = vrcp.pop %v844
        %v846 = vmul.f32 1.0, %v845
        %v847 = vld [vmem:[%s4 + $0x1] sm:$0x1]
        %v848 = vlaneseq
        %v849 = vshrl.u32 %v848, 7
        %v850 = vsub.s32 0, %v849
        %v851 = vrot.slane %v847, %v850
        %v852 = vadd.f32 %v790, %v851
        %v853 = vxor.u32 %v852, 2147483648
        %v854 = vmul.f32 %v853, 1.442695
        %v855 = vpow.pop %v854
        %v856 = vadd.f32 %v855, 1.0
        %v857 = vrcp.pop %v856
        %v858 = vmul.f32 1.0, %v857
        %v859 = vld [vmem:[%s4 + $0x2] sm:$0x1]
        %v860 = vlaneseq
        %v861 = vshrl.u32 %v860, 7
        %v862 = vsub.s32 0, %v861
        %v863 = vrot.slane %v859, %v862
        %v864 = vadd.f32 %v829, %v863
        %v865 = vld [vmem:[%s4 + $0x3] sm:$0x1]
        %v866 = vlaneseq
        %v867 = vshrl.u32 %v866, 7
        %v868 = vsub.s32 0, %v867
        %v869 = vrot.slane %v865, %v868
        %v870 = vadd.f32 %v831, %v869
        %v871 = vmul.f32 %v846, %v870
        %v872 = vadd.f32 %v864, %v871
        %v873 = vtanh.pop %v872
        %v874 = vsub.f32 1.0, %v858
        %v875 = vmul.f32 %v874, %v873
        %v876 = vmul.f32 %v858, %v365
        %v877 = vadd.f32 %v875, %v876
        %v878 = vpack.c.bf16 %v877, %v877
        %v879 = vld [vmem:[#allocation11] sm:$0xf]
        %v880 = vld [vmem:[#allocation11 + $0x4] sm:$0xf]
        %v881 = vld [vmem:[#allocation11 + $0x8] sm:$0xf]
        %v882 = vld [vmem:[#allocation11 + $0xc] sm:$0xf]
        %v883 = vld [vmem:[#allocation11 + $0x10] sm:$0xf]
        %v884 = vld [vmem:[#allocation11 + $0x14] sm:$0xf]
        %v885 = vld [vmem:[#allocation11 + $0x18] sm:$0xf]
        %v886 = vld [vmem:[#allocation11 + $0x1c] sm:$0xf]
        %v887 = vld [vmem:[#allocation11 + $0x20] sm:$0xf]
        %v888 = vld [vmem:[#allocation11 + $0x24] sm:$0xf]
        %v889 = vld [vmem:[#allocation11 + $0x28] sm:$0xf]
        %v890 = vld [vmem:[#allocation11 + $0x2c] sm:$0xf]
        %v891 = vld [vmem:[#allocation11 + $0x30] sm:$0xf]
        %v892 = vld [vmem:[#allocation11 + $0x34] sm:$0xf]
        %v893 = vld [vmem:[#allocation11 + $0x38] sm:$0xf]
        %v894 = vld [vmem:[#allocation11 + $0x3c] sm:$0xf]
        %v895 = vld [vmem:[%s6] sm:$0x1]
        %v897 = vlaneseq
        %v898 = vshrl.u32 %v897, 7
        %v899 = vsub.s32 0, %v898
        %v900 = vrot.slane %v895, %v899
        %v918 = vunpack.c.l.b16 %v879
        %v919 = vunpack.c.l.b16 %v880
        %v920 = vunpack.c.l.b16 %v881
        %v921 = vunpack.c.l.b16 %v882
        %v922 = vunpack.c.l.b16 %v883
        %v923 = vunpack.c.l.b16 %v884
        %v924 = vunpack.c.l.b16 %v885
        %v925 = vunpack.c.l.b16 %v886
        %v926 = vunpack.c.l.b16 %v887
        %v927 = vunpack.c.l.b16 %v888
        %v928 = vunpack.c.l.b16 %v889
        %v929 = vunpack.c.l.b16 %v890
        %v930 = vunpack.c.l.b16 %v891
        %v931 = vunpack.c.l.b16 %v892
        %v932 = vunpack.c.l.b16 %v893
        %v933 = vunpack.c.l.b16 %v894
        %v934 = vpack.c.b16 %v919, %v918
        %v935 = vpack.c.b16 %v921, %v920
        %v936 = vpack.c.b16 %v923, %v922
        %v937 = vpack.c.b16 %v925, %v924
        %v938 = vpack.c.b16 %v927, %v926
        %v939 = vpack.c.b16 %v929, %v928
        %v940 = vpack.c.b16 %v931, %v930
        %v941 = vpack.c.b16 %v933, %v932
        %950 = vmatprep.subr.bf16.mxu0 0
        %951 = vmatpush1.bf16.msra.mxu0 %v934
        %952 = vmatprep.subr.bf16.mxu0 0
        %953 = vmatpush1.bf16.msra.mxu0 %v935
        %954 = vmatprep.subr.bf16.mxu0 0
        %955 = vmatpush1.bf16.msra.mxu0 %v936
        %956 = vmatprep.subr.bf16.mxu0 0
        %957 = vmatpush1.bf16.msra.mxu0 %v937
        %958 = vmatprep.subr.bf16.mxu0 0
        %959 = vmatpush1.bf16.msra.mxu0 %v938
        %960 = vmatprep.subr.bf16.mxu0 0
        %961 = vmatpush1.bf16.msra.mxu0 %v939
        %962 = vmatprep.subr.bf16.mxu0 0
        %963 = vmatpush1.bf16.msra.mxu0 %v940
        %964 = vmatprep.subr.bf16.mxu0 0
        %965 = vmatpush1.bf16.msra.mxu0 %v941
        %966 = vmatprep.subr.bf16.mxu0 0
        %967 = vmatpush1.bf16.msra.mxu0 0
        %968 = vmatprep.subr.bf16.mxu0 0
        %969 = vmatpush1.bf16.msra.mxu0 0
        %970 = vmatprep.subr.bf16.mxu0 0
        %971 = vmatpush1.bf16.msra.mxu0 0
        %972 = vmatprep.subr.bf16.mxu0 0
        %973 = vmatpush1.bf16.msra.mxu0 0
        %974 = vmatprep.subr.bf16.mxu0 0
        %975 = vmatpush1.bf16.msra.mxu0 0
        %976 = vmatprep.subr.bf16.mxu0 0
        %977 = vmatpush1.bf16.msra.mxu0 0
        %978 = vmatprep.subr.bf16.mxu0 0
        %979 = vmatpush1.bf16.msra.mxu0 0
        %980 = vmatprep.subr.bf16.mxu0 0
        %981 = vmatpush1.bf16.msra.mxu0 0
        %982 = vmatprep.mubr.bf16.mxu0 0
        %983 = vmatmul.mubr.bf16.gmra.mrb[0].mxu0 %v878
        %v984 = vpop.f32.mrb[0].mxu0
        %v985 = vadd.f32 %v900, %v984
        %v986 = vpop.f32.mrb[0].mxu0
        %v987 = vpop.f32.mrb[0].mxu0
        %v988 = vpop.f32.mrb[0].mxu0
        %989 = vdwg.mxu0
        %990 = vst [vmem:[%s315] sm:$0xff] %v985
        %991 = vst [vmem:[#allocation2 + $0x8] sm:$0xff] %v877
        %992 = vst [vmem:[#allocation14] sm:$0xff] %v877
        %s993 = sand.u32 %s165, 1
        %s994 = scalar_lea.sflag [#allocation7], %s993
        %s995 = sand.u32 %s165, 1
        %s996 = smul.addr %s995, 8
        %s997 = scalar_lea.vmem [#allocation13], %s996
        // Predicated region
        $region65: #{tpu_custom_call.1} parent=43 // pred_check
          %p998 = pneg %p175
        $region66: #{tpu_custom_call.1} parent=43 // pred_check_branch
          %1000 = sbr.rel (%p998) target = $region68
        $region67: #{tpu_custom_call.1} parent=43 // pred_region
          %s1002 = ssub.s32 128, 128
          %1003 = vsyncadd %s994, %s1002
          %s1004 = smul.addr %s31, 128
          %s1005 = scalar_lea.hbm %s7, %s1004
          %s1007 = sshll.u32 %s997, 4
          %s1008 = int_to_ptr.vmem [resolvable:$true] %s1007
          %1010 = dma.vmem_to_hbm [thread:$0]  %s1008, 128, %s1005, %s994
        $region68: #{tpu_custom_call.1} parent=43 // pred_fallthru
          _
        // Predicated region
        $region69: #{tpu_custom_call.1} parent=43 // pred_check
          %p1011 = pneg %p196
        $region70: #{tpu_custom_call.1} parent=43 // pred_check_branch
          %1013 = sbr.rel (%p1011) target = $region72
        $region71: #{tpu_custom_call.1} parent=43 // pred_region
          %s1015 = ssub.s32 128, 128
          %1016 = vsyncadd [#allocation15], %s1015
          %s1018 = sshll.u32 [#allocation14], 4
          %s1019 = int_to_ptr.vmem [resolvable:$true] %s1018
          %1021 = dma.vmem_to_hbm [thread:$0]  %s1019, 128, %s8, [#allocation15]
        $region72: #{tpu_custom_call.1} parent=43 // pred_fallthru
          _
        // Predicated region
        $region73: #{tpu_custom_call.1} parent=43 // pred_check
          %p1022 = pneg %p196
        $region74: #{tpu_custom_call.1} parent=43 // pred_check_branch
          %1024 = sbr.rel (%p1022) target = $region76
        $region75: #{tpu_custom_call.1} parent=43 // pred_region
          %1025 = dma.done [#allocation15], 128
        $region76: #{tpu_custom_call.1} parent=43 // pred_fallthru
          _
      $region44: #{tpu_custom_call.1} parent=5 // pred_fallthru
        _
      %p1026 = scmp.le.s32.totalorder 2, %s26
      // Predicated region
      $region77: #{tpu_custom_call.1} parent=5 // pred_check
        %p1027 = pneg %p1026
      $region78: #{tpu_custom_call.1} parent=5 // pred_check_branch
        %1029 = sbr.rel (%p1027) target = $region80
      $region79: #{tpu_custom_call.1} parent=5 // pred_region
        %s1030 = ssub.s32 %s26, 2
        // Predicated region
        $region81: #{tpu_custom_call.1} parent=79 // pred_check
          %p1031 = pneg %p181
        $region82: #{tpu_custom_call.1} parent=79 // pred_check_branch
          %1033 = sbr.rel (%p1031) target = $region84
        $region83: #{tpu_custom_call.1} parent=79 // pred_region
          %s1034 = sand.u32 %s166, 1
          %s1035 = scalar_lea.sflag [#allocation7], %s1034
          %s1036 = sand.u32 %s166, 1
          %s1037 = smul.addr %s1036, 8
          %s1038 = scalar_lea.vmem [#allocation13], %s1037
          %1039 = dma.done %s1035, 128
        $region84: #{tpu_custom_call.1} parent=79 // pred_fallthru
          _
      $region80: #{tpu_custom_call.1} parent=5 // pred_fallthru
        _
    $region6: #{tpu_custom_call.1} parent=1 // loop_footer
      %s30 = sadd.s32 1, %s26
    $region7: #{tpu_custom_call.1} parent=1 // loop_footer_branch
      %25 = sbr.rel target = $region3
    $region8: #{tpu_custom_call.1} parent=1 // loop_exit
      _
    %1040 = vsyncpa [#allocation6], 1
    %s1041 = scalar_lea.sflag [#allocation6], 1
    %1042 = vsyncpa %s1041, 1
    %1043 = vsyncpa [#allocation9], 1
    %1044 = vsyncpa [#allocation12], 1
    %1045 = vsyncpa [#allocation7], 1
    %s1046 = scalar_lea.sflag [#allocation7], 1
    %1047 = vsyncpa %s1046, 1
    %1048 = vsyncpa [#allocation15], 1

</llo_original>
